<compile_context>
chip_gen: v7x
topology: tpu7x:2x2x1
jax: 0.10.0
libtpu: 0.0.40
codegen_flags: <defaults>
</compile_context>

<pallas_src>
import jax
import jax.numpy as jnp
import numpy as np
from jax import lax
from jax.experimental import pallas as pl
from jax.experimental.pallas import tpu as pltpu


def annc_kernel(x_ref, w1_ref, w2_ref, b2_ref, wl_ref, bl_ref, o_ref):
    """Fused conv1 -> conv2 -> linear -> sigmoid for one batch slab.

    x_ref : [TB*R2, 9] bf16, row (b, ho*Eq+wo); lane kh*4+k = x[b, 2ho+kh, 4wo+k],
            lane 8 = 1.0 (bias lane)
    w1_ref: [9, 4*C1]  bf16 block-diagonal conv1 weights, row 8 = conv1 bias
    w2_ref: [4*C1, C2] bf16 conv2 weights, row index kh*2*C1 + kw*C1 + c1
    b2_ref: [1, C2]    f32 conv2 bias
    wl_ref: [R2, C2]   f32 linear weights reordered to (ho*Eq+wo, c2)
    bl_ref: [1, 1]     f32 linear bias (SMEM)
    o_ref : [TB, 1]    f32 sigmoid output
    """
    TB = o_ref.shape[0]
    R2, C2 = wl_ref.shape

    # conv1 (1x2, stride (1,2)) + bias + ReLU.  Bias comes in through the
    # constant-1.0 lane of x, so the epilogue is a single bf16 max (cast then
    # ReLU is numerically identical to ReLU then cast).  Output lanes are
    # (kh, kw, c1)-ordered, i.e. exactly the K-fused conv2 LHS.
    h1 = jnp.dot(x_ref[...], w1_ref[...],
                 preferred_element_type=jnp.float32)              # [M, 4*C1]
    h1 = jnp.maximum(h1.astype(jnp.bfloat16), 0)                  # bf16 ReLU

    # conv2 (2x2, stride (2,2)) + ReLU: all 4 taps fused along K = 4*C1.
    h2 = jnp.dot(h1, w2_ref[...],
                 preferred_element_type=jnp.float32)              # [M, C2]
    h2 = jnp.maximum(h2 + b2_ref[...], 0.0)

    # final linear (reduction over (ho, wo, c2) per batch row) + exact sigmoid
    h2 = h2.reshape(TB, R2, C2)
    part = jnp.sum(h2 * wl_ref[...][None, :, :], axis=2)          # [TB, R2]
    logit = jnp.sum(part, axis=1, keepdims=True) + bl_ref[0, 0]   # [TB, 1]
    o_ref[...] = (1.0 / (1.0 + jnp.exp(-logit))).astype(o_ref.dtype)


def _vmem_capacity_bytes():
    """Physical VMEM per TensorCore; conservative fallback if the query fails."""
    try:
        info = pltpu.get_tpu_info()
        cap = getattr(info, "vmem_capacity_bytes", None)
        if cap:
            return int(cap)
    except Exception:
        pass
    return 64 * 1024 * 1024   # v7x-sized conservative default


def _pick_batch_tile(B, R2, max_rows):
    """Pick the batch tile TB.

    Preferences (in order): slab fits the VMEM row budget; >= 2 grid steps
    (so both v7x TensorCores get work); an even number of grid steps; larger
    TB (amortizes the ~0.35 us/step grid overhead).  Tiles are either the
    full batch or a multiple of 8 so the (TB, 1) output block keeps an
    8-aligned sublane dimension.
    """
    cap = min(B, max(1, max_rows // max(R2, 1)))
    candidates = [tb for tb in range(1, B + 1)
                  if B % tb == 0 and (tb % 8 == 0 or tb == B)]

    def score(tb):
        steps = B // tb
        return (tb <= cap, steps >= 2, steps % 2 == 0, tb)

    return max(candidates, key=score)


def annc_prepare_params(params):
    """One-time parameter repack (PyTorch OIHW / [out,in] -> matmul layouts).

    Call once at model init; the per-call wrapper only touches the image.
    """
    conv1_w, conv1_b, conv2_w, conv2_b, lin_w, lin_b = params
    C1 = conv1_w.shape[0]                # 128
    C2 = conv2_w.shape[0]                # 64
    R2 = lin_w.shape[1] // C2            # emb_size // 2
    f32, bf16 = jnp.float32, jnp.bfloat16

    # conv1 as block-diagonal [9, 4*C1]: row kh*4+k -> lane kh*2*C1 + kw*C1 + c1,
    # row 8 = conv1 bias tiled over (kh, kw) (multiplied by the 1.0 input lane).
    w1t = conv1_w[:, 0, 0, :].astype(f32).T                 # [2, C1] (tap, c1)
    blk = jnp.zeros((4, 2 * C1), f32)
    blk = blk.at[0, :C1].set(w1t[0]).at[1, :C1].set(w1t[1])
    blk = blk.at[2, C1:].set(w1t[0]).at[3, C1:].set(w1t[1])
    w1p = jnp.zeros((9, 4 * C1), f32)
    w1p = w1p.at[0:4, 0:2 * C1].set(blk)                    # kh = 0 block
    w1p = w1p.at[4:8, 2 * C1:4 * C1].set(blk)               # kh = 1 block
    w1p = w1p.at[8, :].set(jnp.tile(conv1_b.astype(f32), 4))  # folded bias row
    w1p = w1p.astype(bf16)

    # conv2 weights as [4*C1, C2], row index kh*2*C1 + kw*C1 + c1
    w2p = jnp.transpose(conv2_w, (2, 3, 1, 0)).reshape(4 * C1, C2).astype(bf16)
    b2p = conv2_b[None, :].astype(f32)                      # [1, C2]

    # PyTorch flatten of [B, C2, 2, Eq] is channel-major: idx = c2*R2 + ho*Eq + wo
    wlp = lin_w[0].reshape(C2, R2).T.astype(f32)            # [R2, C2]
    blp = lin_b.reshape(1, 1).astype(f32)
    return (w1p, w2p, b2p, wlp, blp)


def annc_forward(image, packed_params, batch_tile=None):
    """image: [B, 4, emb_size] float32 (stacked a, b, c, d embeddings).

    TODO(synk): dropout (p>0) path not implemented; forward default p=0.
    """
    w1p, w2p, b2p, wlp, blp = packed_params
    B, H, E = image.shape
    assert H == 4 and E % 16 == 0, "emb_size must be a multiple of 16"
    Eq, R2 = E // 4, E // 2
    K = w1p.shape[0]                     # 9 (8 taps + bias lane)
    N1 = w1p.shape[1]                    # 4*C1
    C2 = w2p.shape[1]
    assert wlp.shape == (R2, C2)

    # ---- generation-dependent VMEM budget / batch tile ----
    cap = _vmem_capacity_bytes()
    vmem_limit = max(min(cap * 3 // 4, 112 * 1024 * 1024), 16 * 1024 * 1024)
    bytes_per_row = 5632                 # h1 f32+bf16, h2 f32, dbl-buffered input
    max_rows = max(R2, (vmem_limit * 3 // 4) // bytes_per_row)
    TB = batch_tile if batch_tile is not None else _pick_batch_tile(B, R2, max_rows)
    assert B % TB == 0 and (TB == B or TB % 8 == 0)

    # ---- input layout glue: row (b, ho*Eq+wo), lane kh*4+k = x[b, 2ho+kh, 4wo+k],
    #      lane 8 = 1.0 (conv1 bias lane); shipped in bf16 (halves HBM traffic).
    # TODO(synk): ideally the caller supplies this phase-rearranged bf16 layout
    # directly so this extra HBM pass over the image disappears.
    xph = (image.astype(jnp.bfloat16)
           .reshape(B, 2, 2, Eq, 4)          # (b, ho, kh, wo, k)
           .transpose(0, 1, 3, 2, 4)         # (b, ho, wo, kh, k)
           .reshape(B * R2, 8))
    xph = jnp.concatenate(
        [xph, jnp.ones((B * R2, 1), jnp.bfloat16)], axis=1)        # [B*R2, 9]

    return pl.pallas_call(
        annc_kernel,
        out_shape=jax.ShapeDtypeStruct((B, 1), jnp.float32),
        grid=(B // TB,),
        in_specs=[
            pl.BlockSpec((TB * R2, K), lambda i: (i, 0)),
            pl.BlockSpec((K, N1), lambda i: (0, 0)),
            pl.BlockSpec((N1, C2), lambda i: (0, 0)),
            pl.BlockSpec((1, C2), lambda i: (0, 0)),
            pl.BlockSpec((R2, C2), lambda i: (0, 0)),
            pl.BlockSpec(memory_space=pltpu.MemorySpace.SMEM),
        ],
        out_specs=pl.BlockSpec((TB, 1), lambda i: (i, 0)),
        compiler_params=pltpu.CompilerParams(
            dimension_semantics=("parallel",),
            vmem_limit_bytes=int(vmem_limit),
        ),
    )(xph, w1p, w2p, b2p, wlp, blp)


def annc_reference(image, params):
    """Pure-JAX reference mirroring the PyTorch forward (NCHW convs)."""
    conv1_w, conv1_b, conv2_w, conv2_b, lin_w, lin_b = params
    img = image[:, None, :, :]                                      # [B,1,4,E]
    h = lax.conv_general_dilated(img, conv1_w, window_strides=(1, 2),
                                 padding="VALID",
                                 dimension_numbers=("NCHW", "OIHW", "NCHW"))
    h = jax.nn.relu(h + conv1_b[None, :, None, None])
    h = lax.conv_general_dilated(h, conv2_w, window_strides=(2, 2),
                                 padding="VALID",
                                 dimension_numbers=("NCHW", "OIHW", "NCHW"))
    h = jax.nn.relu(h + conv2_b[None, :, None, None])
    h = h.reshape(h.shape[0], -1)
    h = h @ lin_w.T + lin_b
    return jax.nn.sigmoid(h)


if __name__ == "__main__":
    B = 16          # small batch; the tile picker chooses TB=8 -> grid=(2,)
    emb_size = 32   # small emb_size; must be a multiple of 16

    key = jax.random.PRNGKey(0)
    k_x, k1, k2, k3, k4, k5, k6 = jax.random.split(key, 7)

    # image = stacked (a, b, c, d) embeddings -> [B, 4, emb_size]
    image = jax.random.normal(k_x, (B, 4, emb_size), dtype=jnp.float32)

    # deterministic synthetic parameters with the PyTorch module's shapes
    conv1_w = jax.random.normal(k1, (128, 1, 1, 2), dtype=jnp.float32) * 0.05
    conv1_b = jax.random.normal(k2, (128,), dtype=jnp.float32) * 0.05
    conv2_w = jax.random.normal(k3, (64, 128, 2, 2), dtype=jnp.float32) * 0.05
    conv2_b = jax.random.normal(k4, (64,), dtype=jnp.float32) * 0.05
    lin_w = jax.random.normal(k5, (1, 64 * (emb_size // 2)), dtype=jnp.float32) * 0.05
    lin_b = jax.random.normal(k6, (1,), dtype=jnp.float32) * 0.05
    params = (conv1_w, conv1_b, conv2_w, conv2_b, lin_w, lin_b)

    packed = annc_prepare_params(params)          # one-time repack (model init)
    forward = jax.jit(annc_forward)

    out = jax.block_until_ready(forward(image, packed))
    ref = jax.block_until_ready(annc_reference(image, params))

    # bf16 MXU operands (f32 accumulation) -> slightly looser tolerance vs f32 ref
    np.testing.assert_allclose(np.asarray(out), np.asarray(ref),
                               rtol=2e-2, atol=2e-3)
    assert out.shape == (B, 1)
    print("KERNEL_OK")
</pallas_src>

<mosaic_0001>
module attributes {stable_mosaic.version = 11 : i64} {
  func.func @annc_kernel(%arg0: i32, %arg1: memref<128x9xbf16, #tpu.memory_space<vmem>>, %arg2: memref<9x512xbf16, #tpu.memory_space<vmem>>, %arg3: memref<512x64xbf16, #tpu.memory_space<vmem>>, %arg4: memref<1x64xf32, #tpu.memory_space<vmem>>, %arg5: memref<16x64xf32, #tpu.memory_space<vmem>>, %arg6: memref<1x1xf32, #tpu.memory_space<smem>>, %arg7: memref<8x1xf32, #tpu.memory_space<vmem>>) attributes {dimension_semantics = [#tpu.dimension_semantics<parallel>], iteration_bounds = array<i64: 2>, scalar_prefetch = 0 : i64, scratch_operands = 0 : i64, tpu.core_type = #tpu.core_type<tc>, window_params = [{transform_indices = @transform_0, window_bounds = array<i64: 128, 9>}, {pipeline_mode = #tpu.pipeline_mode<synchronous>, transform_indices = @transform_1, window_bounds = array<i64: 9, 512>}, {pipeline_mode = #tpu.pipeline_mode<synchronous>, transform_indices = @transform_2, window_bounds = array<i64: 512, 64>}, {pipeline_mode = #tpu.pipeline_mode<synchronous>, transform_indices = @transform_3, window_bounds = array<i64: 1, 64>}, {pipeline_mode = #tpu.pipeline_mode<synchronous>, transform_indices = @transform_4, window_bounds = array<i64: 16, 64>}, {transform_indices = @transform_5, window_bounds = array<i64: 1, 1>}, {transform_indices = @transform_6, window_bounds = array<i64: 8, 1>}]} {
    %c0 = arith.constant 0 : index
    %c0_0 = arith.constant 0 : index
    %0 = vector.load %arg1[%c0, %c0_0] : memref<128x9xbf16, #tpu.memory_space<vmem>>, vector<128x9xbf16>
    %c0_1 = arith.constant 0 : index
    %c0_2 = arith.constant 0 : index
    %1 = vector.load %arg2[%c0_1, %c0_2] : memref<9x512xbf16, #tpu.memory_space<vmem>>, vector<9x512xbf16>
    %cst = arith.constant dense<0.000000e+00> : vector<128x512xf32>
    %2 = tpu.matmul %0, %1, %cst {dimension_numbers = #tpu.dot_dimension_numbers<[1], [0], [0], [1], [0, 0, 1, 1], [], []>} : vector<128x9xbf16>, vector<9x512xbf16>, vector<128x512xf32> -> vector<128x512xf32>
    %3 = arith.truncf %2 : vector<128x512xf32> to vector<128x512xbf16>
    %cst_3 = arith.constant 0.000000e+00 : bf16
    %4 = vector.broadcast %cst_3 : bf16 to vector<128x512xbf16>
    %5 = arith.maximumf %3, %4 : vector<128x512xbf16>
    %c0_4 = arith.constant 0 : index
    %c0_5 = arith.constant 0 : index
    %6 = vector.load %arg3[%c0_4, %c0_5] : memref<512x64xbf16, #tpu.memory_space<vmem>>, vector<512x64xbf16>
    %cst_6 = arith.constant dense<0.000000e+00> : vector<128x64xf32>
    %7 = tpu.matmul %5, %6, %cst_6 {dimension_numbers = #tpu.dot_dimension_numbers<[1], [0], [0], [1], [0, 0, 1, 1], [], []>} : vector<128x512xbf16>, vector<512x64xbf16>, vector<128x64xf32> -> vector<128x64xf32>
    %c0_7 = arith.constant 0 : index
    %c0_8 = arith.constant 0 : index
    %8 = vector.load %arg4[%c0_7, %c0_8] : memref<1x64xf32, #tpu.memory_space<vmem>>, vector<1x64xf32>
    %9 = vector.broadcast %8 : vector<1x64xf32> to vector<128x64xf32>
    %10 = arith.addf %7, %9 : vector<128x64xf32>
    %cst_9 = arith.constant 0.000000e+00 : f32
    %11 = vector.broadcast %cst_9 : f32 to vector<128x64xf32>
    %12 = arith.maximumf %10, %11 : vector<128x64xf32>
    %13 = vector.shape_cast %12 : vector<128x64xf32> to vector<8x16x64xf32>
    %c0_10 = arith.constant 0 : index
    %c0_11 = arith.constant 0 : index
    %14 = vector.load %arg5[%c0_10, %c0_11] : memref<16x64xf32, #tpu.memory_space<vmem>>, vector<16x64xf32>
    %15 = vector.shape_cast %14 : vector<16x64xf32> to vector<1x16x64xf32>
    %16 = vector.broadcast %15 : vector<1x16x64xf32> to vector<8x16x64xf32>
    %17 = arith.mulf %13, %16 : vector<8x16x64xf32>
    %cst_12 = arith.constant dense<0.000000e+00> : vector<8x16xf32>
    %18 = vector.multi_reduction <add>, %17, %cst_12 [2] : vector<8x16x64xf32> to vector<8x16xf32>
    %cst_13 = arith.constant dense<0.000000e+00> : vector<8xf32>
    %19 = vector.multi_reduction <add>, %18, %cst_13 [1] : vector<8x16xf32> to vector<8xf32>
    %20 = vector.shape_cast %19 : vector<8xf32> to vector<8x1xf32>
    %c0_14 = arith.constant 0 : index
    %c0_15 = arith.constant 0 : index
    %21 = memref.load %arg6[%c0_14, %c0_15] : memref<1x1xf32, #tpu.memory_space<smem>>
    %22 = vector.broadcast %21 : f32 to vector<8x1xf32>
    %23 = arith.addf %20, %22 : vector<8x1xf32>
    %cst_16 = arith.constant 0.000000e+00 : f32
    %24 = vector.broadcast %cst_16 : f32 to vector<8x1xf32>
    %25 = arith.subf %24, %23 : vector<8x1xf32>
    %26 = math.exp %25 : vector<8x1xf32>
    %cst_17 = arith.constant 1.000000e+00 : f32
    %27 = vector.broadcast %cst_17 : f32 to vector<8x1xf32>
    %28 = arith.addf %27, %26 : vector<8x1xf32>
    %cst_18 = arith.constant 1.000000e+00 : f32
    %29 = vector.broadcast %cst_18 : f32 to vector<8x1xf32>
    %30 = arith.divf %29, %28 : vector<8x1xf32>
    %c0_19 = arith.constant 0 : index
    %c0_20 = arith.constant 0 : index
    %31 = vector.load %arg7[%c0_19, %c0_20] : memref<8x1xf32, #tpu.memory_space<vmem>>, vector<8x1xf32>
    tpu.vector_store %arg7[%c0_19, %c0_20], %30 {strides = array<i32>} : memref<8x1xf32, #tpu.memory_space<vmem>>, vector<8x1xf32>,
    return
  }
  func.func @transform_0(%arg0: i32) -> (i32, i32) {
    %c0_i32 = arith.constant 0 : i32
    %c0_i32_0 = arith.constant 0 : i32
    return %arg0, %c0_i32 : i32, i32
  }
  func.func @transform_1(%arg0: i32) -> (i32, i32) {
    %c0_i32 = arith.constant 0 : i32
    %c0_i32_0 = arith.constant 0 : i32
    %c0_i32_1 = arith.constant 0 : i32
    return %c0_i32, %c0_i32_0 : i32, i32
  }
  func.func @transform_2(%arg0: i32) -> (i32, i32) {
    %c0_i32 = arith.constant 0 : i32
    %c0_i32_0 = arith.constant 0 : i32
    %c0_i32_1 = arith.constant 0 : i32
    return %c0_i32, %c0_i32_0 : i32, i32
  }
  func.func @transform_3(%arg0: i32) -> (i32, i32) {
    %c0_i32 = arith.constant 0 : i32
    %c0_i32_0 = arith.constant 0 : i32
    %c0_i32_1 = arith.constant 0 : i32
    return %c0_i32, %c0_i32_0 : i32, i32
  }
  func.func @transform_4(%arg0: i32) -> (i32, i32) {
    %c0_i32 = arith.constant 0 : i32
    %c0_i32_0 = arith.constant 0 : i32
    %c0_i32_1 = arith.constant 0 : i32
    return %c0_i32, %c0_i32_0 : i32, i32
  }
  func.func @transform_5(%arg0: i32) -> (i32, i32) {
    %c0_i32 = arith.constant 0 : i32
    %c0_i32_0 = arith.constant 0 : i32
    %c0_i32_1 = arith.constant 0 : i32
    return %c0_i32, %c0_i32_0 : i32, i32
  }
  func.func @transform_6(%arg0: i32) -> (i32, i32) {
    %c0_i32 = arith.constant 0 : i32
    %c0_i32_0 = arith.constant 0 : i32
    return %arg0, %c0_i32 : i32, i32
  }
}

</mosaic_0001>

<llo_original>
// kernel: annc_forward.1
$region0: #{annc_forward.1}
  #allocation0 [shape = 'u32[]', space=smem, size = 0x4, offset = 0x4, fixed_abs, tag = 'smem constant byte address 0x4 - core index']
  #allocation1 [shape = 'u32[144,128]{1,0:T(1,128)}', space=vmem, size = 0x12000, scoped, tag = 'internal scratch']
  #allocation2 [shape = 'f32[1,1]{1,0:T(1,128)S(6)}', space=smem, size = 0x200, scoped, tag = 'scoped memory for annc_forward.1']
  %s0 = inlined_call_operand.vmem [shape: bf16[256,9], index: 0, kind: input, shape index: {}]
  %s1 = inlined_call_operand.vmem [shape: bf16[9,512], index: 1, kind: input, shape index: {}]
  %s2 = inlined_call_operand.vmem [shape: bf16[512,64], index: 2, kind: input, shape index: {}]
  %s3 = inlined_call_operand.vmem [shape: f32[1,64], index: 3, kind: input, shape index: {}]
  %s4 = inlined_call_operand.vmem [shape: f32[16,64], index: 4, kind: input, shape index: {}]
  %s5 = inlined_call_operand.<no memory space> [shape: f32[1,1], index: 5, kind: input, shape index: {}]
  %s6 = inlined_call_operand.vmem [shape: f32[16,1], index: 6, kind: output, shape index: {}]
  %s7 = sld [smem:[#allocation0]]
  $region57: #{annc_forward.1} parent=0
    _
  %s9 = ssub.s32 1, %s7
  %s10 = scalar_select 0, %s9, %s7
  %11 = sst [smem:[#allocation2]] %s5
  loop: start=0, step=1, limit=4
  $region2: #{annc_forward.1} parent=0 // loop_pre_header
    _
  $region3: #{annc_forward.1} parent=0 // loop_header
    %s13 = sphi 0, %s17
    %p14 = scmp.ge.s32.totalorder %s13, 4
    %s23 = sphi 0, %s25
    %s26 = sphi 0, %s23
    %s27 = sphi 0, %s26
    %s43 = sphi 0, %s27
    %s47 = sphi 0, %s47
    %s49 = sphi 0, %s47
    %s50 = sphi 0, %s49
    %s64 = sphi 0, %s50
    %s68 = sphi 0, %s68
    %s70 = sphi 0, %s68
    %s71 = sphi 0, %s70
    %s85 = sphi 0, %s71
    %s89 = sphi 0, %s89
    %s91 = sphi 0, %s89
    %s92 = sphi 0, %s91
    %s106 = sphi 0, %s92
    %s110 = sphi 0, %s110
    %s112 = sphi 0, %s110
    %s113 = sphi 0, %s112
    %s127 = sphi 0, %s113
    %s131 = sphi 0, %s131
    %s133 = sphi 0, %s131
    %s134 = sphi 0, %s133
    %s148 = sphi 0, %s134
    %s154 = sphi 0, %s156
    %s157 = sphi 0, %s154
    %s158 = sphi 0, %s157
    %s174 = sphi 0, %s158
  $region4: #{annc_forward.1} parent=0 // loop_header_branch
    %16 = sbr.rel (%p14) target = $region8
  $region5: #{annc_forward.1} parent=0 // loop_body
    %s18 = ssub.s32 %s13, 1
    %s19 = ssub.s32 %s13, 2
    %s20 = sadd.s32 %s13, 1
    %s21 = ssub.s32 %s13, %s20
    %p22 = scmp.eq.s32.totalorder %s21, 0
    %s24 = sadd.s32 %s23, 1
    %s25 = scalar_select %p22, %s23, %s24
    %p28 = pneg %p22
    %p29 = scmp.eq.s32.totalorder %s13, 1
    %p30 = por %p28, %p29
    %p31 = scmp.ne.s32.totalorder %s23, %s26
    %p32 = scmp.eq.s32.totalorder %s13, 0
    %p33 = por %p31, %p32
    %p34 = scmp.ne.s32.totalorder %s23, %s26
    %p35 = scmp.eq.s32.totalorder %s18, 1
    %p36 = por %p34, %p35
    %p37 = scmp.ne.s32.totalorder %s26, %s27
    %p38 = scmp.eq.s32.totalorder %s18, 0
    %p39 = por %p37, %p38
    %p40 = scmp.ne.s32.totalorder %s26, %s27
    %p41 = scmp.eq.s32.totalorder %s19, 1
    %p42 = por %p40, %p41
    %p44 = scmp.ne.s32.totalorder %s27, %s43
    %p45 = scmp.eq.s32.totalorder %s19, 0
    %p46 = por %p44, %p45
    %s48 = sadd.s32 %s47, 1
    %p51 = scmp.eq.s32.totalorder %s13, 1
    %p52 = scmp.ne.s32.totalorder %s47, %s49
    %p53 = scmp.eq.s32.totalorder %s13, 0
    %p54 = por %p52, %p53
    %p55 = scmp.ne.s32.totalorder %s47, %s49
    %p56 = scmp.eq.s32.totalorder %s18, 1
    %p57 = por %p55, %p56
    %p58 = scmp.ne.s32.totalorder %s49, %s50
    %p59 = scmp.eq.s32.totalorder %s18, 0
    %p60 = por %p58, %p59
    %p61 = scmp.ne.s32.totalorder %s49, %s50
    %p62 = scmp.eq.s32.totalorder %s19, 1
    %p63 = por %p61, %p62
    %p65 = scmp.ne.s32.totalorder %s50, %s64
    %p66 = scmp.eq.s32.totalorder %s19, 0
    %p67 = por %p65, %p66
    %s69 = sadd.s32 %s68, 1
    %p72 = scmp.eq.s32.totalorder %s13, 1
    %p73 = scmp.ne.s32.totalorder %s68, %s70
    %p74 = scmp.eq.s32.totalorder %s13, 0
    %p75 = por %p73, %p74
    %p76 = scmp.ne.s32.totalorder %s68, %s70
    %p77 = scmp.eq.s32.totalorder %s18, 1
    %p78 = por %p76, %p77
    %p79 = scmp.ne.s32.totalorder %s70, %s71
    %p80 = scmp.eq.s32.totalorder %s18, 0
    %p81 = por %p79, %p80
    %p82 = scmp.ne.s32.totalorder %s70, %s71
    %p83 = scmp.eq.s32.totalorder %s19, 1
    %p84 = por %p82, %p83
    %p86 = scmp.ne.s32.totalorder %s71, %s85
    %p87 = scmp.eq.s32.totalorder %s19, 0
    %p88 = por %p86, %p87
    %s90 = sadd.s32 %s89, 1
    %p93 = scmp.eq.s32.totalorder %s13, 1
    %p94 = scmp.ne.s32.totalorder %s89, %s91
    %p95 = scmp.eq.s32.totalorder %s13, 0
    %p96 = por %p94, %p95
    %p97 = scmp.ne.s32.totalorder %s89, %s91
    %p98 = scmp.eq.s32.totalorder %s18, 1
    %p99 = por %p97, %p98
    %p100 = scmp.ne.s32.totalorder %s91, %s92
    %p101 = scmp.eq.s32.totalorder %s18, 0
    %p102 = por %p100, %p101
    %p103 = scmp.ne.s32.totalorder %s91, %s92
    %p104 = scmp.eq.s32.totalorder %s19, 1
    %p105 = por %p103, %p104
    %p107 = scmp.ne.s32.totalorder %s92, %s106
    %p108 = scmp.eq.s32.totalorder %s19, 0
    %p109 = por %p107, %p108
    %s111 = sadd.s32 %s110, 1
    %p114 = scmp.eq.s32.totalorder %s13, 1
    %p115 = scmp.ne.s32.totalorder %s110, %s112
    %p116 = scmp.eq.s32.totalorder %s13, 0
    %p117 = por %p115, %p116
    %p118 = scmp.ne.s32.totalorder %s110, %s112
    %p119 = scmp.eq.s32.totalorder %s18, 1
    %p120 = por %p118, %p119
    %p121 = scmp.ne.s32.totalorder %s112, %s113
    %p122 = scmp.eq.s32.totalorder %s18, 0
    %p123 = por %p121, %p122
    %p124 = scmp.ne.s32.totalorder %s112, %s113
    %p125 = scmp.eq.s32.totalorder %s19, 1
    %p126 = por %p124, %p125
    %p128 = scmp.ne.s32.totalorder %s113, %s127
    %p129 = scmp.eq.s32.totalorder %s19, 0
    %p130 = por %p128, %p129
    %s132 = sadd.s32 %s131, 1
    %p135 = scmp.eq.s32.totalorder %s13, 1
    %p136 = scmp.ne.s32.totalorder %s131, %s133
    %p137 = scmp.eq.s32.totalorder %s13, 0
    %p138 = por %p136, %p137
    %p139 = scmp.ne.s32.totalorder %s131, %s133
    %p140 = scmp.eq.s32.totalorder %s18, 1
    %p141 = por %p139, %p140
    %p142 = scmp.ne.s32.totalorder %s133, %s134
    %p143 = scmp.eq.s32.totalorder %s18, 0
    %p144 = por %p142, %p143
    %p145 = scmp.ne.s32.totalorder %s133, %s134
    %p146 = scmp.eq.s32.totalorder %s19, 1
    %p147 = por %p145, %p146
    %p149 = scmp.ne.s32.totalorder %s134, %s148
    %p150 = scmp.eq.s32.totalorder %s19, 0
    %p151 = por %p149, %p150
    %s152 = ssub.s32 %s13, %s20
    %p153 = scmp.eq.s32.totalorder %s152, 0
    %s155 = sadd.s32 %s154, 1
    %s156 = scalar_select %p153, %s154, %s155
    %p159 = pneg %p153
    %p160 = scmp.eq.s32.totalorder %s13, 1
    %p161 = por %p159, %p160
    %p162 = scmp.ne.s32.totalorder %s154, %s157
    %p163 = scmp.eq.s32.totalorder %s13, 0
    %p164 = por %p162, %p163
    %p165 = scmp.ne.s32.totalorder %s154, %s157
    %p166 = scmp.eq.s32.totalorder %s18, 1
    %p167 = por %p165, %p166
    %p168 = scmp.ne.s32.totalorder %s157, %s158
    %p169 = scmp.eq.s32.totalorder %s18, 0
    %p170 = por %p168, %p169
    %p171 = scmp.ne.s32.totalorder %s157, %s158
    %p172 = scmp.eq.s32.totalorder %s19, 1
    %p173 = por %p171, %p172
    %p175 = scmp.ne.s32.totalorder %s158, %s174
    %p176 = scmp.eq.s32.totalorder %s19, 0
    %p177 = por %p175, %p176
    %p178 = scmp.le.s32.totalorder 1, %s13
    %p179 = scmp.lt.s32.totalorder %s13, 3
    %p180 = pnand %p178, %p179
    %p181 = pneg %p180
    // Predicated region
    $region9: #{annc_forward.1} parent=5 // pred_check
      _
    $region10: #{annc_forward.1} parent=5 // pred_check_branch
      %183 = sbr.rel (%p180) target = $region12
    $region11: #{annc_forward.1} parent=5 // pred_region
      %s184 = ssub.s32 %s13, 1
      // Predicated region
      $region13: #{annc_forward.1} parent=11 // pred_check
        %p185 = pneg %p60
      $region14: #{annc_forward.1} parent=11 // pred_check_branch
        %187 = sbr.rel (%p185) target = $region16
      $region15: #{annc_forward.1} parent=11 // pred_region
        _
      $region16: #{annc_forward.1} parent=11 // pred_fallthru
        _
      // Predicated region
      $region17: #{annc_forward.1} parent=11 // pred_check
        %p188 = pneg %p81
      $region18: #{annc_forward.1} parent=11 // pred_check_branch
        %190 = sbr.rel (%p188) target = $region20
      $region19: #{annc_forward.1} parent=11 // pred_region
        _
      $region20: #{annc_forward.1} parent=11 // pred_fallthru
        _
      // Predicated region
      $region21: #{annc_forward.1} parent=11 // pred_check
        %p191 = pneg %p102
      $region22: #{annc_forward.1} parent=11 // pred_check_branch
        %193 = sbr.rel (%p191) target = $region24
      $region23: #{annc_forward.1} parent=11 // pred_region
        _
      $region24: #{annc_forward.1} parent=11 // pred_fallthru
        _
      // Predicated region
      $region25: #{annc_forward.1} parent=11 // pred_check
        %p194 = pneg %p123
      $region26: #{annc_forward.1} parent=11 // pred_check_branch
        %196 = sbr.rel (%p194) target = $region28
      $region27: #{annc_forward.1} parent=11 // pred_region
        _
      $region28: #{annc_forward.1} parent=11 // pred_fallthru
        _
      // Predicated region
      $region29: #{annc_forward.1} parent=11 // pred_check
        %p197 = pneg %p144
      $region30: #{annc_forward.1} parent=11 // pred_check_branch
        %199 = sbr.rel (%p197) target = $region32
      $region31: #{annc_forward.1} parent=11 // pred_region
        _
      $region32: #{annc_forward.1} parent=11 // pred_fallthru
        _
    $region12: #{annc_forward.1} parent=5 // pred_fallthru
      _
    %p200 = scmp.lt.s32.totalorder %s13, 2
    // Predicated region
    $region33: #{annc_forward.1} parent=5 // pred_check
      %p201 = pneg %p200
    $region34: #{annc_forward.1} parent=5 // pred_check_branch
      %203 = sbr.rel (%p201) target = $region36
    $region35: #{annc_forward.1} parent=5 // pred_region
      // Predicated region
      $region37: #{annc_forward.1} parent=35 // pred_check
        %p204 = pneg %p33
      $region38: #{annc_forward.1} parent=35 // pred_check_branch
        %206 = sbr.rel (%p204) target = $region40
      $region39: #{annc_forward.1} parent=35 // pred_region
        %s207 = smul.u32 16, %s13
        %p208 = scmp.lt.s32.totalorder %s207, 31
        %s209 = scalar_select %p208, %s207, 31
        %s210 = smul.addr %s209, 4
        %s211 = scalar_lea.vmem %s0, %s210
        %s212 = smul.u32 16, %s13
      $region40: #{annc_forward.1} parent=35 // pred_fallthru
        _
    $region36: #{annc_forward.1} parent=5 // pred_fallthru
      _
    %p213 = scmp.le.s32.totalorder 1, %s13
    %p214 = scmp.lt.s32.totalorder %s13, 3
    %p215 = pnand %p213, %p214
    %p216 = pneg %p215
    // Predicated region
    $region41: #{annc_forward.1} parent=5 // pred_check
      _
    $region42: #{annc_forward.1} parent=5 // pred_check_branch
      %218 = sbr.rel (%p215) target = $region44
    $region43: #{annc_forward.1} parent=5 // pred_region
      %s219 = ssub.s32 %s13, 1
      %s220 = smul.u32 16, %s18
      %p221 = scmp.lt.s32.totalorder %s220, 31
      %s222 = scalar_select %p221, %s220, 31
      %s223 = smul.addr %s222, 4
      %s224 = scalar_lea.vmem %s0, %s223
      %p225 = pneg %p39
      %p226 = pneg %p36
      %p227 = pneg %p60
      %p228 = pneg %p57
      %p229 = pneg %p81
      %p230 = pneg %p78
      %p231 = pneg %p102
      %p232 = pneg %p99
      %p233 = pneg %p123
      %p234 = pneg %p120
      %p235 = pneg %p144
      %p236 = pneg %p141
      %p237 = pneg %p170
      %p238 = pneg %p167
      %p239 = scmp.lt.s32.totalorder %s18, 1
      %s240 = scalar_select %p239, %s18, 1
      %s241 = smul.addr %s240, 8
      %s242 = scalar_lea.vmem %s6, %s241
      %s243 = smul.u32 16, %s18
      %p244 = scmp.lt.s32.totalorder %s243, 31
      %s245 = scalar_select %p244, %s243, 31
      %s246 = smul.addr %s245, 4
      %s247 = scalar_lea.vmem %s0, %s246
      %s248 = smul.u32 16, %s18
      %p249 = scmp.lt.s32.totalorder %s18, 1
      %s250 = scalar_select %p249, %s18, 1
      %s251 = smul.addr %s250, 8
      %s252 = scalar_lea.vmem %s6, %s251
      %v254 = vld [vmem:[%s247] sm:$0xf]
      %v255 = vld [vmem:[%s247 + $0x4] sm:$0xf]
      %v256 = vld [vmem:[%s247 + $0x8] sm:$0xf]
      %v257 = vld [vmem:[%s247 + $0xc] sm:$0xf]
      %v258 = vld [vmem:[%s247 + $0x10] sm:$0xf]
      %v259 = vld [vmem:[%s247 + $0x14] sm:$0xf]
      %v260 = vld [vmem:[%s247 + $0x18] sm:$0xf]
      %v261 = vld [vmem:[%s247 + $0x1c] sm:$0xf]
      %v262 = vld [vmem:[%s247 + $0x20] sm:$0xf]
      %v263 = vld [vmem:[%s247 + $0x24] sm:$0xf]
      %v264 = vld [vmem:[%s247 + $0x28] sm:$0xf]
      %v265 = vld [vmem:[%s247 + $0x2c] sm:$0xf]
      %v266 = vld [vmem:[%s247 + $0x30] sm:$0xf]
      %v267 = vld [vmem:[%s247 + $0x34] sm:$0xf]
      %v268 = vld [vmem:[%s247 + $0x38] sm:$0xf]
      %v269 = vld [vmem:[%s247 + $0x3c] sm:$0xf]
      %v270 = vld [vmem:[%s1] sm:$0xff]
      %v271 = vld [vmem:[%s1 + $0x8] sm:$0xff]
      %v272 = vld [vmem:[%s1 + $0x10] sm:$0x11]
      %v273 = vld [vmem:[%s1 + $0x18] sm:$0x11]
      %v290 = vunpack.c.l.b16 %v254
      %v291 = vunpack.c.l.b16 %v255
      %v292 = vunpack.c.l.b16 %v256
      %v293 = vunpack.c.l.b16 %v257
      %v294 = vunpack.c.l.b16 %v258
      %v295 = vunpack.c.l.b16 %v259
      %v296 = vunpack.c.l.b16 %v260
      %v297 = vunpack.c.l.b16 %v261
      %v298 = vunpack.c.l.b16 %v262
      %v299 = vunpack.c.l.b16 %v263
      %v300 = vunpack.c.l.b16 %v264
      %v301 = vunpack.c.l.b16 %v265
      %v302 = vunpack.c.l.b16 %v266
      %v303 = vunpack.c.l.b16 %v267
      %v304 = vunpack.c.l.b16 %v268
      %v305 = vunpack.c.l.b16 %v269
      %v306 = vpack.c.b16 %v291, %v290
      %v307 = vpack.c.b16 %v293, %v292
      %v308 = vpack.c.b16 %v295, %v294
      %v309 = vpack.c.b16 %v297, %v296
      %v310 = vpack.c.b16 %v299, %v298
      %v311 = vpack.c.b16 %v301, %v300
      %v312 = vpack.c.b16 %v303, %v302
      %v313 = vpack.c.b16 %v305, %v304
      %v318 = vunpack.c.l.b16 %v270
      %v319 = vunpack.c.h.b16 %v270
      %v320 = vunpack.c.l.b16 %v271
      %v321 = vunpack.c.h.b16 %v271
      %v322 = vunpack.c.l.b16 %v272
      %v323 = vunpack.c.h.b16 %v272
      %v324 = vunpack.c.l.b16 %v273
      %v325 = vunpack.c.h.b16 %v273
      %v326 = vpack.c.b16 %v322, %v318
      %v327 = vpack.c.b16 %v323, %v319
      %v328 = vpack.c.b16 %v324, %v320
      %v329 = vpack.c.b16 %v325, %v321
      %vm330 = vcmask 72704
      %v332 = vsel %vm330, %v306, 0
      %v335 = vsel %vm330, %v307, 0
      %v338 = vsel %vm330, %v308, 0
      %v341 = vsel %vm330, %v309, 0
      %v344 = vsel %vm330, %v310, 0
      %v347 = vsel %vm330, %v311, 0
      %v350 = vsel %vm330, %v312, 0
      %v353 = vsel %vm330, %v313, 0
      %vm355 = vcmask 1043456
      %vm356 = vcmask 1044480
      %v357 = vsel %vm355, 4294967295, 65535
      %v358 = vsel %vm356, %v357, 0
      %v360 = vand.u32 %v326, %v358
      %v363 = vand.u32 %v327, %v358
      %v366 = vand.u32 %v328, %v358
      %v369 = vand.u32 %v329, %v358
      %371 = vmatprep.subr.bf16.mxu0 %v363
      %372 = vmatpush1.bf16.msra.mxu0 %v360
      %373 = vmatprep.subr.bf16.mxu0 0
      %374 = vmatpush1.bf16.msra.mxu0 0
      %375 = vmatprep.subr.bf16.mxu0 0
      %376 = vmatpush1.bf16.msra.mxu0 0
      %377 = vmatprep.subr.bf16.mxu0 0
      %378 = vmatpush1.bf16.msra.mxu0 0
      %379 = vmatprep.subr.bf16.mxu0 0
      %380 = vmatpush1.bf16.msra.mxu0 0
      %381 = vmatprep.subr.bf16.mxu0 0
      %382 = vmatpush1.bf16.msra.mxu0 0
      %383 = vmatprep.subr.bf16.mxu0 0
      %384 = vmatpush1.bf16.msra.mxu0 0
      %385 = vmatprep.subr.bf16.mxu0 0
      %386 = vmatpush1.bf16.msra.mxu0 0
      %387 = vmatprep.subr.bf16.mxu0 0
      %388 = vmatpush1.bf16.msra.mxu0 0
      %389 = vmatprep.subr.bf16.mxu0 0
      %390 = vmatpush1.bf16.msra.mxu0 0
      %391 = vmatprep.subr.bf16.mxu0 0
      %392 = vmatpush1.bf16.msra.mxu0 0
      %393 = vmatprep.subr.bf16.mxu0 0
      %394 = vmatpush1.bf16.msra.mxu0 0
      %395 = vmatprep.subr.bf16.mxu0 0
      %396 = vmatpush1.bf16.msra.mxu0 0
      %397 = vmatprep.subr.bf16.mxu0 0
      %398 = vmatpush1.bf16.msra.mxu0 0
      %399 = vmatprep.subr.bf16.mxu0 0
      %400 = vmatpush1.bf16.msra.mxu0 0
      %401 = vmatprep.subr.bf16.mxu0 0
      %402 = vmatpush1.bf16.msra.mxu0 0
      %403 = vmatprep.mubr.bf16.mxu0 0
      %404 = vmatmul.mubr.bf16.gmra.mrb[0].mxu0 %v332
      %v405 = vpop.f32.mrb[0].mxu0
      %v406 = vadd.f32 0.0, %v405
      %v407 = vpop.f32.mrb[0].mxu0
      %v408 = vadd.f32 0.0, %v407
      %v409 = vpop.f32.mrb[0].mxu0
      %v410 = vadd.f32 0.0, %v409
      %v411 = vpop.f32.mrb[0].mxu0
      %v412 = vadd.f32 0.0, %v411
      %413 = vmatprep.mubr.bf16.mxu0 0
      %414 = vmatmul.mubr.bf16.gmra.mrb[0].mxu0 %v335
      %v415 = vpop.f32.mrb[0].mxu0
      %v416 = vadd.f32 0.0, %v415
      %v417 = vpop.f32.mrb[0].mxu0
      %v418 = vadd.f32 0.0, %v417
      %v419 = vpop.f32.mrb[0].mxu0
      %v420 = vadd.f32 0.0, %v419
      %v421 = vpop.f32.mrb[0].mxu0
      %v422 = vadd.f32 0.0, %v421
      %423 = vmatprep.mubr.bf16.mxu0 0
      %424 = vmatmul.mubr.bf16.gmra.mrb[0].mxu0 %v338
      %v425 = vpop.f32.mrb[0].mxu0
      %v426 = vadd.f32 0.0, %v425
      %v427 = vpop.f32.mrb[0].mxu0
      %v428 = vadd.f32 0.0, %v427
      %v429 = vpop.f32.mrb[0].mxu0
      %v430 = vadd.f32 0.0, %v429
      %v431 = vpop.f32.mrb[0].mxu0
      %v432 = vadd.f32 0.0, %v431
      %433 = vmatprep.mubr.bf16.mxu0 0
      %434 = vmatmul.mubr.bf16.gmra.mrb[0].mxu0 %v341
      %v435 = vpop.f32.mrb[0].mxu0
      %v436 = vadd.f32 0.0, %v435
      %v437 = vpop.f32.mrb[0].mxu0
      %v438 = vadd.f32 0.0, %v437
      %v439 = vpop.f32.mrb[0].mxu0
      %v440 = vadd.f32 0.0, %v439
      %v441 = vpop.f32.mrb[0].mxu0
      %v442 = vadd.f32 0.0, %v441
      %443 = vmatprep.mubr.bf16.mxu0 0
      %444 = vmatmul.mubr.bf16.gmra.mrb[0].mxu0 %v344
      %v445 = vpop.f32.mrb[0].mxu0
      %v446 = vadd.f32 0.0, %v445
      %v447 = vpop.f32.mrb[0].mxu0
      %v448 = vadd.f32 0.0, %v447
      %v449 = vpop.f32.mrb[0].mxu0
      %v450 = vadd.f32 0.0, %v449
      %v451 = vpop.f32.mrb[0].mxu0
      %v452 = vadd.f32 0.0, %v451
      %453 = vmatprep.mubr.bf16.mxu0 0
      %454 = vmatmul.mubr.bf16.gmra.mrb[0].mxu0 %v347
      %v455 = vpop.f32.mrb[0].mxu0
      %v456 = vadd.f32 0.0, %v455
      %v457 = vpop.f32.mrb[0].mxu0
      %v458 = vadd.f32 0.0, %v457
      %v459 = vpop.f32.mrb[0].mxu0
      %v460 = vadd.f32 0.0, %v459
      %v461 = vpop.f32.mrb[0].mxu0
      %v462 = vadd.f32 0.0, %v461
      %463 = vmatprep.mubr.bf16.mxu0 0
      %464 = vmatmul.mubr.bf16.gmra.mrb[0].mxu0 %v350
      %v465 = vpop.f32.mrb[0].mxu0
      %v466 = vadd.f32 0.0, %v465
      %v467 = vpop.f32.mrb[0].mxu0
      %v468 = vadd.f32 0.0, %v467
      %v469 = vpop.f32.mrb[0].mxu0
      %v470 = vadd.f32 0.0, %v469
      %v471 = vpop.f32.mrb[0].mxu0
      %v472 = vadd.f32 0.0, %v471
      %473 = vmatprep.mubr.bf16.mxu0 0
      %474 = vmatmul.mubr.bf16.gmra.mrb[0].mxu0 %v353
      %v475 = vpop.f32.mrb[0].mxu0
      %v476 = vadd.f32 0.0, %v475
      %v477 = vpop.f32.mrb[0].mxu0
      %v478 = vadd.f32 0.0, %v477
      %v479 = vpop.f32.mrb[0].mxu0
      %v480 = vadd.f32 0.0, %v479
      %v481 = vpop.f32.mrb[0].mxu0
      %v482 = vadd.f32 0.0, %v481
      %483 = vdwg.mxu0
      %484 = vmatprep.subr.bf16.mxu0 %v369
      %485 = vmatpush1.bf16.msra.mxu0 %v366
      %486 = vmatprep.subr.bf16.mxu0 0
      %487 = vmatpush1.bf16.msra.mxu0 0
      %488 = vmatprep.subr.bf16.mxu0 0
      %489 = vmatpush1.bf16.msra.mxu0 0
      %490 = vmatprep.subr.bf16.mxu0 0
      %491 = vmatpush1.bf16.msra.mxu0 0
      %492 = vmatprep.subr.bf16.mxu0 0
      %493 = vmatpush1.bf16.msra.mxu0 0
      %494 = vmatprep.subr.bf16.mxu0 0
      %495 = vmatpush1.bf16.msra.mxu0 0
      %496 = vmatprep.subr.bf16.mxu0 0
      %497 = vmatpush1.bf16.msra.mxu0 0
      %498 = vmatprep.subr.bf16.mxu0 0
      %499 = vmatpush1.bf16.msra.mxu0 0
      %500 = vmatprep.subr.bf16.mxu0 0
      %501 = vmatpush1.bf16.msra.mxu0 0
      %502 = vmatprep.subr.bf16.mxu0 0
      %503 = vmatpush1.bf16.msra.mxu0 0
      %504 = vmatprep.subr.bf16.mxu0 0
      %505 = vmatpush1.bf16.msra.mxu0 0
      %506 = vmatprep.subr.bf16.mxu0 0
      %507 = vmatpush1.bf16.msra.mxu0 0
      %508 = vmatprep.subr.bf16.mxu0 0
      %509 = vmatpush1.bf16.msra.mxu0 0
      %510 = vmatprep.subr.bf16.mxu0 0
      %511 = vmatpush1.bf16.msra.mxu0 0
      %512 = vmatprep.subr.bf16.mxu0 0
      %513 = vmatpush1.bf16.msra.mxu0 0
      %514 = vmatprep.subr.bf16.mxu0 0
      %515 = vmatpush1.bf16.msra.mxu0 0
      %516 = vmatprep.mubr.bf16.mxu0 0
      %517 = vmatmul.mubr.bf16.gmra.mrb[0].mxu0 %v332
      %v518 = vpop.f32.mrb[0].mxu0
      %v519 = vadd.f32 0.0, %v518
      %v520 = vpop.f32.mrb[0].mxu0
      %v521 = vadd.f32 0.0, %v520
      %v522 = vpop.f32.mrb[0].mxu0
      %v523 = vadd.f32 0.0, %v522
      %v524 = vpop.f32.mrb[0].mxu0
      %v525 = vadd.f32 0.0, %v524
      %526 = vmatprep.mubr.bf16.mxu0 0
      %527 = vmatmul.mubr.bf16.gmra.mrb[0].mxu0 %v335
      %v528 = vpop.f32.mrb[0].mxu0
      %v529 = vadd.f32 0.0, %v528
      %v530 = vpop.f32.mrb[0].mxu0
      %v531 = vadd.f32 0.0, %v530
      %v532 = vpop.f32.mrb[0].mxu0
      %v533 = vadd.f32 0.0, %v532
      %v534 = vpop.f32.mrb[0].mxu0
      %v535 = vadd.f32 0.0, %v534
      %536 = vmatprep.mubr.bf16.mxu0 0
      %537 = vmatmul.mubr.bf16.gmra.mrb[0].mxu0 %v338
      %v538 = vpop.f32.mrb[0].mxu0
      %v539 = vadd.f32 0.0, %v538
      %v540 = vpop.f32.mrb[0].mxu0
      %v541 = vadd.f32 0.0, %v540
      %v542 = vpop.f32.mrb[0].mxu0
      %v543 = vadd.f32 0.0, %v542
      %v544 = vpop.f32.mrb[0].mxu0
      %v545 = vadd.f32 0.0, %v544
      %546 = vmatprep.mubr.bf16.mxu0 0
      %547 = vmatmul.mubr.bf16.gmra.mrb[0].mxu0 %v341
      %v548 = vpop.f32.mrb[0].mxu0
      %v549 = vadd.f32 0.0, %v548
      %v550 = vpop.f32.mrb[0].mxu0
      %v551 = vadd.f32 0.0, %v550
      %v552 = vpop.f32.mrb[0].mxu0
      %v553 = vadd.f32 0.0, %v552
      %v554 = vpop.f32.mrb[0].mxu0
      %v555 = vadd.f32 0.0, %v554
      %556 = vmatprep.mubr.bf16.mxu0 0
      %557 = vmatmul.mubr.bf16.gmra.mrb[0].mxu0 %v344
      %v558 = vpop.f32.mrb[0].mxu0
      %v559 = vadd.f32 0.0, %v558
      %v560 = vpop.f32.mrb[0].mxu0
      %v561 = vadd.f32 0.0, %v560
      %v562 = vpop.f32.mrb[0].mxu0
      %v563 = vadd.f32 0.0, %v562
      %v564 = vpop.f32.mrb[0].mxu0
      %v565 = vadd.f32 0.0, %v564
      %566 = vmatprep.mubr.bf16.mxu0 0
      %567 = vmatmul.mubr.bf16.gmra.mrb[0].mxu0 %v347
      %v568 = vpop.f32.mrb[0].mxu0
      %v569 = vadd.f32 0.0, %v568
      %v570 = vpop.f32.mrb[0].mxu0
      %v571 = vadd.f32 0.0, %v570
      %v572 = vpop.f32.mrb[0].mxu0
      %v573 = vadd.f32 0.0, %v572
      %v574 = vpop.f32.mrb[0].mxu0
      %v575 = vadd.f32 0.0, %v574
      %576 = vmatprep.mubr.bf16.mxu0 0
      %577 = vmatmul.mubr.bf16.gmra.mrb[0].mxu0 %v350
      %v578 = vpop.f32.mrb[0].mxu0
      %v579 = vadd.f32 0.0, %v578
      %v580 = vpop.f32.mrb[0].mxu0
      %v581 = vadd.f32 0.0, %v580
      %v582 = vpop.f32.mrb[0].mxu0
      %v583 = vadd.f32 0.0, %v582
      %v584 = vpop.f32.mrb[0].mxu0
      %v585 = vadd.f32 0.0, %v584
      %586 = vmatprep.mubr.bf16.mxu0 0
      %587 = vmatmul.mubr.bf16.gmra.mrb[0].mxu0 %v353
      %v588 = vpop.f32.mrb[0].mxu0
      %v589 = vadd.f32 0.0, %v588
      %v590 = vpop.f32.mrb[0].mxu0
      %v591 = vadd.f32 0.0, %v590
      %v592 = vpop.f32.mrb[0].mxu0
      %v593 = vadd.f32 0.0, %v592
      %v594 = vpop.f32.mrb[0].mxu0
      %v595 = vadd.f32 0.0, %v594
      %596 = vdwg.mxu0
      %v597 = vpack.c.bf16 %v410, %v406
      %v598 = vpack.c.bf16 %v412, %v408
      %v599 = vpack.c.bf16 %v523, %v519
      %v600 = vpack.c.bf16 %v525, %v521
      %v601 = vpack.c.bf16 %v420, %v416
      %v602 = vpack.c.bf16 %v422, %v418
      %v603 = vpack.c.bf16 %v533, %v529
      %v604 = vpack.c.bf16 %v535, %v531
      %v605 = vpack.c.bf16 %v430, %v426
      %v606 = vpack.c.bf16 %v432, %v428
      %v607 = vpack.c.bf16 %v543, %v539
      %v608 = vpack.c.bf16 %v545, %v541
      %v609 = vpack.c.bf16 %v440, %v436
      %v610 = vpack.c.bf16 %v442, %v438
      %v611 = vpack.c.bf16 %v553, %v549
      %v612 = vpack.c.bf16 %v555, %v551
      %v613 = vpack.c.bf16 %v450, %v446
      %v614 = vpack.c.bf16 %v452, %v448
      %v615 = vpack.c.bf16 %v563, %v559
      %v616 = vpack.c.bf16 %v565, %v561
      %v617 = vpack.c.bf16 %v460, %v456
      %v618 = vpack.c.bf16 %v462, %v458
      %v619 = vpack.c.bf16 %v573, %v569
      %v620 = vpack.c.bf16 %v575, %v571
      %v621 = vpack.c.bf16 %v470, %v466
      %v622 = vpack.c.bf16 %v472, %v468
      %v623 = vpack.c.bf16 %v583, %v579
      %v624 = vpack.c.bf16 %v585, %v581
      %v625 = vpack.c.bf16 %v480, %v476
      %v626 = vpack.c.bf16 %v482, %v478
      %v627 = vpack.c.bf16 %v593, %v589
      %v628 = vpack.c.bf16 %v595, %v591
      %v629 = vmax.bf16 %v597, 0
      %v630 = vmax.bf16 %v598, 0
      %v631 = vmax.bf16 %v599, 0
      %v632 = vmax.bf16 %v600, 0
      %v633 = vmax.bf16 %v601, 0
      %v634 = vmax.bf16 %v602, 0
      %v635 = vmax.bf16 %v603, 0
      %v636 = vmax.bf16 %v604, 0
      %v637 = vmax.bf16 %v605, 0
      %v638 = vmax.bf16 %v606, 0
      %v639 = vmax.bf16 %v607, 0
      %v640 = vmax.bf16 %v608, 0
      %v641 = vmax.bf16 %v609, 0
      %v642 = vmax.bf16 %v610, 0
      %v643 = vmax.bf16 %v611, 0
      %v644 = vmax.bf16 %v612, 0
      %v645 = vmax.bf16 %v613, 0
      %v646 = vmax.bf16 %v614, 0
      %v647 = vmax.bf16 %v615, 0
      %v648 = vmax.bf16 %v616, 0
      %v649 = vmax.bf16 %v617, 0
      %v650 = vmax.bf16 %v618, 0
      %v651 = vmax.bf16 %v619, 0
      %v652 = vmax.bf16 %v620, 0
      %v653 = vmax.bf16 %v621, 0
      %v654 = vmax.bf16 %v622, 0
      %v655 = vmax.bf16 %v623, 0
      %v656 = vmax.bf16 %v624, 0
      %v657 = vmax.bf16 %v625, 0
      %v658 = vmax.bf16 %v626, 0
      %v659 = vmax.bf16 %v627, 0
      %v660 = vmax.bf16 %v628, 0
      %v661 = vld [vmem:[%s2] sm:$0xf]
      %v662 = vld [vmem:[%s2 + $0x4] sm:$0xf]
      %v663 = vld [vmem:[%s2 + $0x8] sm:$0xf]
      %v664 = vld [vmem:[%s2 + $0xc] sm:$0xf]
      %v665 = vld [vmem:[%s2 + $0x10] sm:$0xf]
      %v666 = vld [vmem:[%s2 + $0x14] sm:$0xf]
      %v667 = vld [vmem:[%s2 + $0x18] sm:$0xf]
      %v668 = vld [vmem:[%s2 + $0x1c] sm:$0xf]
      %v669 = vld [vmem:[%s2 + $0x20] sm:$0xf]
      %v670 = vld [vmem:[%s2 + $0x24] sm:$0xf]
      %v671 = vld [vmem:[%s2 + $0x28] sm:$0xf]
      %v672 = vld [vmem:[%s2 + $0x2c] sm:$0xf]
      %v673 = vld [vmem:[%s2 + $0x30] sm:$0xf]
      %v674 = vld [vmem:[%s2 + $0x34] sm:$0xf]
      %v675 = vld [vmem:[%s2 + $0x38] sm:$0xf]
      %v676 = vld [vmem:[%s2 + $0x3c] sm:$0xf]
      %v677 = vld [vmem:[%s2 + $0x40] sm:$0xf]
      %v678 = vld [vmem:[%s2 + $0x44] sm:$0xf]
      %v679 = vld [vmem:[%s2 + $0x48] sm:$0xf]
      %v680 = vld [vmem:[%s2 + $0x4c] sm:$0xf]
      %v681 = vld [vmem:[%s2 + $0x50] sm:$0xf]
      %v682 = vld [vmem:[%s2 + $0x54] sm:$0xf]
      %v683 = vld [vmem:[%s2 + $0x58] sm:$0xf]
      %v684 = vld [vmem:[%s2 + $0x5c] sm:$0xf]
      %v685 = vld [vmem:[%s2 + $0x60] sm:$0xf]
      %v686 = vld [vmem:[%s2 + $0x64] sm:$0xf]
      %v687 = vld [vmem:[%s2 + $0x68] sm:$0xf]
      %v688 = vld [vmem:[%s2 + $0x6c] sm:$0xf]
      %v689 = vld [vmem:[%s2 + $0x70] sm:$0xf]
      %v690 = vld [vmem:[%s2 + $0x74] sm:$0xf]
      %v691 = vld [vmem:[%s2 + $0x78] sm:$0xf]
      %v692 = vld [vmem:[%s2 + $0x7c] sm:$0xf]
      %v693 = vld [vmem:[%s2 + $0x80] sm:$0xf]
      %v694 = vld [vmem:[%s2 + $0x84] sm:$0xf]
      %v695 = vld [vmem:[%s2 + $0x88] sm:$0xf]
      %v696 = vld [vmem:[%s2 + $0x8c] sm:$0xf]
      %v697 = vld [vmem:[%s2 + $0x90] sm:$0xf]
      %v698 = vld [vmem:[%s2 + $0x94] sm:$0xf]
      %v699 = vld [vmem:[%s2 + $0x98] sm:$0xf]
      %v700 = vld [vmem:[%s2 + $0x9c] sm:$0xf]
      %v701 = vld [vmem:[%s2 + $0xa0] sm:$0xf]
      %v702 = vld [vmem:[%s2 + $0xa4] sm:$0xf]
      %v703 = vld [vmem:[%s2 + $0xa8] sm:$0xf]
      %v704 = vld [vmem:[%s2 + $0xac] sm:$0xf]
      %v705 = vld [vmem:[%s2 + $0xb0] sm:$0xf]
      %v706 = vld [vmem:[%s2 + $0xb4] sm:$0xf]
      %v707 = vld [vmem:[%s2 + $0xb8] sm:$0xf]
      %v708 = vld [vmem:[%s2 + $0xbc] sm:$0xf]
      %v709 = vld [vmem:[%s2 + $0xc0] sm:$0xf]
      %v710 = vld [vmem:[%s2 + $0xc4] sm:$0xf]
      %v711 = vld [vmem:[%s2 + $0xc8] sm:$0xf]
      %v712 = vld [vmem:[%s2 + $0xcc] sm:$0xf]
      %v713 = vld [vmem:[%s2 + $0xd0] sm:$0xf]
      %v714 = vld [vmem:[%s2 + $0xd4] sm:$0xf]
      %v715 = vld [vmem:[%s2 + $0xd8] sm:$0xf]
      %v716 = vld [vmem:[%s2 + $0xdc] sm:$0xf]
      %v717 = vld [vmem:[%s2 + $0xe0] sm:$0xf]
      %v718 = vld [vmem:[%s2 + $0xe4] sm:$0xf]
      %v719 = vld [vmem:[%s2 + $0xe8] sm:$0xf]
      %v720 = vld [vmem:[%s2 + $0xec] sm:$0xf]
      %v721 = vld [vmem:[%s2 + $0xf0] sm:$0xf]
      %v722 = vld [vmem:[%s2 + $0xf4] sm:$0xf]
      %v723 = vld [vmem:[%s2 + $0xf8] sm:$0xf]
      %v724 = vld [vmem:[%s2 + $0xfc] sm:$0xf]
      %v725 = vld [vmem:[%s3] sm:$0x1]
      %v727 = vlaneseq
      %v728 = vshrl.u32 %v727, 7
      %v729 = vsub.s32 0, %v728
      %v730 = vrot.slane %v725, %v729
      %v796 = vunpack.c.l.b16 %v661
      %v797 = vunpack.c.l.b16 %v662
      %v798 = vunpack.c.l.b16 %v663
      %v799 = vunpack.c.l.b16 %v664
      %v800 = vunpack.c.l.b16 %v665
      %v801 = vunpack.c.l.b16 %v666
      %v802 = vunpack.c.l.b16 %v667
      %v803 = vunpack.c.l.b16 %v668
      %v804 = vunpack.c.l.b16 %v669
      %v805 = vunpack.c.l.b16 %v670
      %v806 = vunpack.c.l.b16 %v671
      %v807 = vunpack.c.l.b16 %v672
      %v808 = vunpack.c.l.b16 %v673
      %v809 = vunpack.c.l.b16 %v674
      %v810 = vunpack.c.l.b16 %v675
      %v811 = vunpack.c.l.b16 %v676
      %v812 = vunpack.c.l.b16 %v677
      %v813 = vunpack.c.l.b16 %v678
      %v814 = vunpack.c.l.b16 %v679
      %v815 = vunpack.c.l.b16 %v680
      %v816 = vunpack.c.l.b16 %v681
      %v817 = vunpack.c.l.b16 %v682
      %v818 = vunpack.c.l.b16 %v683
      %v819 = vunpack.c.l.b16 %v684
      %v820 = vunpack.c.l.b16 %v685
      %v821 = vunpack.c.l.b16 %v686
      %v822 = vunpack.c.l.b16 %v687
      %v823 = vunpack.c.l.b16 %v688
      %v824 = vunpack.c.l.b16 %v689
      %v825 = vunpack.c.l.b16 %v690
      %v826 = vunpack.c.l.b16 %v691
      %v827 = vunpack.c.l.b16 %v692
      %v828 = vunpack.c.l.b16 %v693
      %v829 = vunpack.c.l.b16 %v694
      %v830 = vunpack.c.l.b16 %v695
      %v831 = vunpack.c.l.b16 %v696
      %v832 = vunpack.c.l.b16 %v697
      %v833 = vunpack.c.l.b16 %v698
      %v834 = vunpack.c.l.b16 %v699
      %v835 = vunpack.c.l.b16 %v700
      %v836 = vunpack.c.l.b16 %v701
      %v837 = vunpack.c.l.b16 %v702
      %v838 = vunpack.c.l.b16 %v703
      %v839 = vunpack.c.l.b16 %v704
      %v840 = vunpack.c.l.b16 %v705
      %v841 = vunpack.c.l.b16 %v706
      %v842 = vunpack.c.l.b16 %v707
      %v843 = vunpack.c.l.b16 %v708
      %v844 = vunpack.c.l.b16 %v709
      %v845 = vunpack.c.l.b16 %v710
      %v846 = vunpack.c.l.b16 %v711
      %v847 = vunpack.c.l.b16 %v712
      %v848 = vunpack.c.l.b16 %v713
      %v849 = vunpack.c.l.b16 %v714
      %v850 = vunpack.c.l.b16 %v715
      %v851 = vunpack.c.l.b16 %v716
      %v852 = vunpack.c.l.b16 %v717
      %v853 = vunpack.c.l.b16 %v718
      %v854 = vunpack.c.l.b16 %v719
      %v855 = vunpack.c.l.b16 %v720
      %v856 = vunpack.c.l.b16 %v721
      %v857 = vunpack.c.l.b16 %v722
      %v858 = vunpack.c.l.b16 %v723
      %v859 = vunpack.c.l.b16 %v724
      %v860 = vpack.c.b16 %v797, %v796
      %v861 = vpack.c.b16 %v799, %v798
      %v862 = vpack.c.b16 %v801, %v800
      %v863 = vpack.c.b16 %v803, %v802
      %v864 = vpack.c.b16 %v805, %v804
      %v865 = vpack.c.b16 %v807, %v806
      %v866 = vpack.c.b16 %v809, %v808
      %v867 = vpack.c.b16 %v811, %v810
      %v868 = vpack.c.b16 %v813, %v812
      %v869 = vpack.c.b16 %v815, %v814
      %v870 = vpack.c.b16 %v817, %v816
      %v871 = vpack.c.b16 %v819, %v818
      %v872 = vpack.c.b16 %v821, %v820
      %v873 = vpack.c.b16 %v823, %v822
      %v874 = vpack.c.b16 %v825, %v824
      %v875 = vpack.c.b16 %v827, %v826
      %v876 = vpack.c.b16 %v829, %v828
      %v877 = vpack.c.b16 %v831, %v830
      %v878 = vpack.c.b16 %v833, %v832
      %v879 = vpack.c.b16 %v835, %v834
      %v880 = vpack.c.b16 %v837, %v836
      %v881 = vpack.c.b16 %v839, %v838
      %v882 = vpack.c.b16 %v841, %v840
      %v883 = vpack.c.b16 %v843, %v842
      %v884 = vpack.c.b16 %v845, %v844
      %v885 = vpack.c.b16 %v847, %v846
      %v886 = vpack.c.b16 %v849, %v848
      %v887 = vpack.c.b16 %v851, %v850
      %v888 = vpack.c.b16 %v853, %v852
      %v889 = vpack.c.b16 %v855, %v854
      %v890 = vpack.c.b16 %v857, %v856
      %v891 = vpack.c.b16 %v859, %v858
      %924 = vmatprep.subr.bf16.mxu0 0
      %925 = vmatpush1.bf16.msra.mxu0 %v860
      %926 = vmatprep.subr.bf16.mxu0 0
      %927 = vmatpush1.bf16.msra.mxu0 %v861
      %928 = vmatprep.subr.bf16.mxu0 0
      %929 = vmatpush1.bf16.msra.mxu0 %v862
      %930 = vmatprep.subr.bf16.mxu0 0
      %931 = vmatpush1.bf16.msra.mxu0 %v863
      %932 = vmatprep.subr.bf16.mxu0 0
      %933 = vmatpush1.bf16.msra.mxu0 %v864
      %934 = vmatprep.subr.bf16.mxu0 0
      %935 = vmatpush1.bf16.msra.mxu0 %v865
      %936 = vmatprep.subr.bf16.mxu0 0
      %937 = vmatpush1.bf16.msra.mxu0 %v866
      %938 = vmatprep.subr.bf16.mxu0 0
      %939 = vmatpush1.bf16.msra.mxu0 %v867
      %940 = vmatprep.subr.bf16.mxu0 0
      %941 = vmatpush1.bf16.msra.mxu0 %v868
      %942 = vmatprep.subr.bf16.mxu0 0
      %943 = vmatpush1.bf16.msra.mxu0 %v869
      %944 = vmatprep.subr.bf16.mxu0 0
      %945 = vmatpush1.bf16.msra.mxu0 %v870
      %946 = vmatprep.subr.bf16.mxu0 0
      %947 = vmatpush1.bf16.msra.mxu0 %v871
      %948 = vmatprep.subr.bf16.mxu0 0
      %949 = vmatpush1.bf16.msra.mxu0 %v872
      %950 = vmatprep.subr.bf16.mxu0 0
      %951 = vmatpush1.bf16.msra.mxu0 %v873
      %952 = vmatprep.subr.bf16.mxu0 0
      %953 = vmatpush1.bf16.msra.mxu0 %v874
      %954 = vmatprep.subr.bf16.mxu0 0
      %955 = vmatpush1.bf16.msra.mxu0 %v875
      %956 = vmatprep.mubr.bf16.mxu0 %v630
      %957 = vmatmul.mubr.bf16.gmra.mrb[0].mxu0 %v629
      %v958 = vpop.f32.mrb[0].mxu0
      %v959 = vadd.f32 %v730, %v958
      %v960 = vpop.f32.mrb[0].mxu0
      %v961 = vpop.f32.mrb[0].mxu0
      %v962 = vadd.f32 %v730, %v961
      %v963 = vpop.f32.mrb[0].mxu0
      %964 = vmatprep.mubr.bf16.mxu0 %v634
      %965 = vmatmul.mubr.bf16.gmra.mrb[0].mxu0 %v633
      %v966 = vpop.f32.mrb[0].mxu0
      %v967 = vadd.f32 %v730, %v966
      %v968 = vpop.f32.mrb[0].mxu0
      %v969 = vpop.f32.mrb[0].mxu0
      %v970 = vadd.f32 %v730, %v969
      %v971 = vpop.f32.mrb[0].mxu0
      %972 = vmatprep.mubr.bf16.mxu0 %v638
      %973 = vmatmul.mubr.bf16.gmra.mrb[0].mxu0 %v637
      %v974 = vpop.f32.mrb[0].mxu0
      %v975 = vadd.f32 %v730, %v974
      %v976 = vpop.f32.mrb[0].mxu0
      %v977 = vpop.f32.mrb[0].mxu0
      %v978 = vadd.f32 %v730, %v977
      %v979 = vpop.f32.mrb[0].mxu0
      %980 = vmatprep.mubr.bf16.mxu0 %v642
      %981 = vmatmul.mubr.bf16.gmra.mrb[0].mxu0 %v641
      %v982 = vpop.f32.mrb[0].mxu0
      %v983 = vadd.f32 %v730, %v982
      %v984 = vpop.f32.mrb[0].mxu0
      %v985 = vpop.f32.mrb[0].mxu0
      %v986 = vadd.f32 %v730, %v985
      %v987 = vpop.f32.mrb[0].mxu0
      %988 = vmatprep.mubr.bf16.mxu0 %v646
      %989 = vmatmul.mubr.bf16.gmra.mrb[0].mxu0 %v645
      %v990 = vpop.f32.mrb[0].mxu0
      %v991 = vadd.f32 %v730, %v990
      %v992 = vpop.f32.mrb[0].mxu0
      %v993 = vpop.f32.mrb[0].mxu0
      %v994 = vadd.f32 %v730, %v993
      %v995 = vpop.f32.mrb[0].mxu0
      %996 = vmatprep.mubr.bf16.mxu0 %v650
      %997 = vmatmul.mubr.bf16.gmra.mrb[0].mxu0 %v649
      %v998 = vpop.f32.mrb[0].mxu0
      %v999 = vadd.f32 %v730, %v998
      %v1000 = vpop.f32.mrb[0].mxu0
      %v1001 = vpop.f32.mrb[0].mxu0
      %v1002 = vadd.f32 %v730, %v1001
      %v1003 = vpop.f32.mrb[0].mxu0
      %1004 = vmatprep.mubr.bf16.mxu0 %v654
      %1005 = vmatmul.mubr.bf16.gmra.mrb[0].mxu0 %v653
      %v1006 = vpop.f32.mrb[0].mxu0
      %v1007 = vadd.f32 %v730, %v1006
      %v1008 = vpop.f32.mrb[0].mxu0
      %v1009 = vpop.f32.mrb[0].mxu0
      %v1010 = vadd.f32 %v730, %v1009
      %v1011 = vpop.f32.mrb[0].mxu0
      %1012 = vmatprep.mubr.bf16.mxu0 %v658
      %1013 = vmatmul.mubr.bf16.gmra.mrb[0].mxu0 %v657
      %v1014 = vpop.f32.mrb[0].mxu0
      %v1015 = vadd.f32 %v730, %v1014
      %v1016 = vpop.f32.mrb[0].mxu0
      %v1017 = vpop.f32.mrb[0].mxu0
      %v1018 = vadd.f32 %v730, %v1017
      %v1019 = vpop.f32.mrb[0].mxu0
      %1020 = vdwg.mxu0
      %1021 = vmatprep.subr.bf16.mxu0 0
      %1022 = vmatpush1.bf16.msra.mxu0 %v876
      %1023 = vmatprep.subr.bf16.mxu0 0
      %1024 = vmatpush1.bf16.msra.mxu0 %v877
      %1025 = vmatprep.subr.bf16.mxu0 0
      %1026 = vmatpush1.bf16.msra.mxu0 %v878
      %1027 = vmatprep.subr.bf16.mxu0 0
      %1028 = vmatpush1.bf16.msra.mxu0 %v879
      %1029 = vmatprep.subr.bf16.mxu0 0
      %1030 = vmatpush1.bf16.msra.mxu0 %v880
      %1031 = vmatprep.subr.bf16.mxu0 0
      %1032 = vmatpush1.bf16.msra.mxu0 %v881
      %1033 = vmatprep.subr.bf16.mxu0 0
      %1034 = vmatpush1.bf16.msra.mxu0 %v882
      %1035 = vmatprep.subr.bf16.mxu0 0
      %1036 = vmatpush1.bf16.msra.mxu0 %v883
      %1037 = vmatprep.subr.bf16.mxu0 0
      %1038 = vmatpush1.bf16.msra.mxu0 %v884
      %1039 = vmatprep.subr.bf16.mxu0 0
      %1040 = vmatpush1.bf16.msra.mxu0 %v885
      %1041 = vmatprep.subr.bf16.mxu0 0
      %1042 = vmatpush1.bf16.msra.mxu0 %v886
      %1043 = vmatprep.subr.bf16.mxu0 0
      %1044 = vmatpush1.bf16.msra.mxu0 %v887
      %1045 = vmatprep.subr.bf16.mxu0 0
      %1046 = vmatpush1.bf16.msra.mxu0 %v888
      %1047 = vmatprep.subr.bf16.mxu0 0
      %1048 = vmatpush1.bf16.msra.mxu0 %v889
      %1049 = vmatprep.subr.bf16.mxu0 0
      %1050 = vmatpush1.bf16.msra.mxu0 %v890
      %1051 = vmatprep.subr.bf16.mxu0 0
      %1052 = vmatpush1.bf16.msra.mxu0 %v891
      %1053 = vmatprep.mubr.bf16.mxu0 %v632
      %1054 = vmatmul.mubr.bf16.gmra.mrb[0].mxu0 %v631
      %v1055 = vpop.f32.mrb[0].mxu0
      %v1056 = vadd.f32 %v959, %v1055
      %v1057 = vpop.f32.mrb[0].mxu0
      %v1058 = vpop.f32.mrb[0].mxu0
      %v1059 = vadd.f32 %v962, %v1058
      %v1060 = vpop.f32.mrb[0].mxu0
      %1061 = vmatprep.mubr.bf16.mxu0 %v636
      %1062 = vmatmul.mubr.bf16.gmra.mrb[0].mxu0 %v635
      %v1063 = vpop.f32.mrb[0].mxu0
      %v1064 = vadd.f32 %v967, %v1063
      %v1065 = vpop.f32.mrb[0].mxu0
      %v1066 = vpop.f32.mrb[0].mxu0
      %v1067 = vadd.f32 %v970, %v1066
      %v1068 = vpop.f32.mrb[0].mxu0
      %1069 = vmatprep.mubr.bf16.mxu0 %v640
      %1070 = vmatmul.mubr.bf16.gmra.mrb[0].mxu0 %v639
      %v1071 = vpop.f32.mrb[0].mxu0
      %v1072 = vadd.f32 %v975, %v1071
      %v1073 = vpop.f32.mrb[0].mxu0
      %v1074 = vpop.f32.mrb[0].mxu0
      %v1075 = vadd.f32 %v978, %v1074
      %v1076 = vpop.f32.mrb[0].mxu0
      %1077 = vmatprep.mubr.bf16.mxu0 %v644
      %1078 = vmatmul.mubr.bf16.gmra.mrb[0].mxu0 %v643
      %v1079 = vpop.f32.mrb[0].mxu0
      %v1080 = vadd.f32 %v983, %v1079
      %v1081 = vpop.f32.mrb[0].mxu0
      %v1082 = vpop.f32.mrb[0].mxu0
      %v1083 = vadd.f32 %v986, %v1082
      %v1084 = vpop.f32.mrb[0].mxu0
      %1085 = vmatprep.mubr.bf16.mxu0 %v648
      %1086 = vmatmul.mubr.bf16.gmra.mrb[0].mxu0 %v647
      %v1087 = vpop.f32.mrb[0].mxu0
      %v1088 = vadd.f32 %v991, %v1087
      %v1089 = vpop.f32.mrb[0].mxu0
      %v1090 = vpop.f32.mrb[0].mxu0
      %v1091 = vadd.f32 %v994, %v1090
      %v1092 = vpop.f32.mrb[0].mxu0
      %1093 = vmatprep.mubr.bf16.mxu0 %v652
      %1094 = vmatmul.mubr.bf16.gmra.mrb[0].mxu0 %v651
      %v1095 = vpop.f32.mrb[0].mxu0
      %v1096 = vadd.f32 %v999, %v1095
      %v1097 = vpop.f32.mrb[0].mxu0
      %v1098 = vpop.f32.mrb[0].mxu0
      %v1099 = vadd.f32 %v1002, %v1098
      %v1100 = vpop.f32.mrb[0].mxu0
      %1101 = vmatprep.mubr.bf16.mxu0 %v656
      %1102 = vmatmul.mubr.bf16.gmra.mrb[0].mxu0 %v655
      %v1103 = vpop.f32.mrb[0].mxu0
      %v1104 = vadd.f32 %v1007, %v1103
      %v1105 = vpop.f32.mrb[0].mxu0
      %v1106 = vpop.f32.mrb[0].mxu0
      %v1107 = vadd.f32 %v1010, %v1106
      %v1108 = vpop.f32.mrb[0].mxu0
      %1109 = vmatprep.mubr.bf16.mxu0 %v660
      %1110 = vmatmul.mubr.bf16.gmra.mrb[0].mxu0 %v659
      %v1111 = vpop.f32.mrb[0].mxu0
      %v1112 = vadd.f32 %v1015, %v1111
      %v1113 = vpop.f32.mrb[0].mxu0
      %v1114 = vpop.f32.mrb[0].mxu0
      %v1115 = vadd.f32 %v1018, %v1114
      %v1116 = vpop.f32.mrb[0].mxu0
      %1117 = vdwg.mxu0
      %v1118 = vmax.f32 %v1056, 0.0
      %v1119 = vmax.f32 %v1059, 0.0
      %v1120 = vmax.f32 %v1064, 0.0
      %v1121 = vmax.f32 %v1067, 0.0
      %v1122 = vmax.f32 %v1072, 0.0
      %v1123 = vmax.f32 %v1075, 0.0
      %v1124 = vmax.f32 %v1080, 0.0
      %v1125 = vmax.f32 %v1083, 0.0
      %v1126 = vmax.f32 %v1088, 0.0
      %v1127 = vmax.f32 %v1091, 0.0
      %v1128 = vmax.f32 %v1096, 0.0
      %v1129 = vmax.f32 %v1099, 0.0
      %v1130 = vmax.f32 %v1104, 0.0
      %v1131 = vmax.f32 %v1107, 0.0
      %v1132 = vmax.f32 %v1112, 0.0
      %v1133 = vmax.f32 %v1115, 0.0
      %v1134 = vld [vmem:[%s4] sm:$0xff]
      %v1135 = vld [vmem:[%s4 + $0x8] sm:$0xff]
      %v1136 = vmul.f32 %v1118, %v1134
      %v1137 = vmul.f32 %v1119, %v1135
      %v1138 = vmul.f32 %v1120, %v1134
      %v1139 = vmul.f32 %v1121, %v1135
      %v1140 = vmul.f32 %v1122, %v1134
      %v1141 = vmul.f32 %v1123, %v1135
      %v1142 = vmul.f32 %v1124, %v1134
      %v1143 = vmul.f32 %v1125, %v1135
      %v1144 = vmul.f32 %v1126, %v1134
      %v1145 = vmul.f32 %v1127, %v1135
      %v1146 = vmul.f32 %v1128, %v1134
      %v1147 = vmul.f32 %v1129, %v1135
      %v1148 = vmul.f32 %v1130, %v1134
      %v1149 = vmul.f32 %v1131, %v1135
      %v1150 = vmul.f32 %v1132, %v1134
      %v1151 = vmul.f32 %v1133, %v1135
      %vm1152 = vcmask 523264
      %v1153 = vsel %vm1152, %v1136, 0.0
      %1154 = vadd.xlane.f32.xlu0 %v1153
      %v1155 = vpop.xlane.xlu0 %1154
      %v1156 = vsel %vm1152, %v1137, 0.0
      %1157 = vadd.xlane.f32.xlu0 %v1156
      %v1158 = vpop.xlane.xlu0 %1157
      %v1159 = vsel %vm1152, %v1138, 0.0
      %1160 = vadd.xlane.f32.xlu0 %v1159
      %v1161 = vpop.xlane.xlu0 %1160
      %v1162 = vsel %vm1152, %v1139, 0.0
      %1163 = vadd.xlane.f32.xlu0 %v1162
      %v1164 = vpop.xlane.xlu0 %1163
      %v1165 = vsel %vm1152, %v1140, 0.0
      %1166 = vadd.xlane.f32.xlu0 %v1165
      %v1167 = vpop.xlane.xlu0 %1166
      %v1168 = vsel %vm1152, %v1141, 0.0
      %1169 = vadd.xlane.f32.xlu0 %v1168
      %v1170 = vpop.xlane.xlu0 %1169
      %v1171 = vsel %vm1152, %v1142, 0.0
      %1172 = vadd.xlane.f32.xlu0 %v1171
      %v1173 = vpop.xlane.xlu0 %1172
      %v1174 = vsel %vm1152, %v1143, 0.0
      %1175 = vadd.xlane.f32.xlu0 %v1174
      %v1176 = vpop.xlane.xlu0 %1175
      %v1177 = vsel %vm1152, %v1144, 0.0
      %1178 = vadd.xlane.f32.xlu0 %v1177
      %v1179 = vpop.xlane.xlu0 %1178
      %v1180 = vsel %vm1152, %v1145, 0.0
      %1181 = vadd.xlane.f32.xlu0 %v1180
      %v1182 = vpop.xlane.xlu0 %1181
      %v1183 = vsel %vm1152, %v1146, 0.0
      %1184 = vadd.xlane.f32.xlu0 %v1183
      %v1185 = vpop.xlane.xlu0 %1184
      %v1186 = vsel %vm1152, %v1147, 0.0
      %1187 = vadd.xlane.f32.xlu0 %v1186
      %v1188 = vpop.xlane.xlu0 %1187
      %v1189 = vsel %vm1152, %v1148, 0.0
      %1190 = vadd.xlane.f32.xlu0 %v1189
      %v1191 = vpop.xlane.xlu0 %1190
      %v1192 = vsel %vm1152, %v1149, 0.0
      %1193 = vadd.xlane.f32.xlu0 %v1192
      %v1194 = vpop.xlane.xlu0 %1193
      %v1195 = vsel %vm1152, %v1150, 0.0
      %1196 = vadd.xlane.f32.xlu0 %v1195
      %v1197 = vpop.xlane.xlu0 %1196
      %v1198 = vsel %vm1152, %v1151, 0.0
      %1199 = vadd.xlane.f32.xlu0 %v1198
      %v1200 = vpop.xlane.xlu0 %1199
      %v1217 = vlaneseq
      %v1218 = vand.u32 %v1217, 127
      %v1219 = vlaneseq
      %v1220 = vshrl.u32 %v1219, 7
      %v1221 = vsub.s32 %v1218, %v1220
      %v1222 = vrot.slane %v1155, %v1221
      %v1223 = vadd.s32 %v1218, 4294967288
      %v1224 = vlaneseq
      %v1225 = vshrl.u32 %v1224, 7
      %v1226 = vsub.s32 %v1223, %v1225
      %v1227 = vrot.slane %v1158, %v1226
      %vm1228 = vcmask 130112
      %v1229 = vsel %vm1228, %v1227, %v1222
      %v1230 = vlaneseq
      %v1231 = vshrl.u32 %v1230, 7
      %v1232 = vsub.s32 %v1218, %v1231
      %v1233 = vrot.slane %v1161, %v1232
      %v1234 = vlaneseq
      %v1235 = vshrl.u32 %v1234, 7
      %v1236 = vsub.s32 %v1223, %v1235
      %v1237 = vrot.slane %v1164, %v1236
      %v1238 = vsel %vm1228, %v1237, %v1233
      %v1239 = vlaneseq
      %v1240 = vshrl.u32 %v1239, 7
      %v1241 = vsub.s32 %v1218, %v1240
      %v1242 = vrot.slane %v1167, %v1241
      %v1243 = vlaneseq
      %v1244 = vshrl.u32 %v1243, 7
      %v1245 = vsub.s32 %v1223, %v1244
      %v1246 = vrot.slane %v1170, %v1245
      %v1247 = vsel %vm1228, %v1246, %v1242
      %v1248 = vlaneseq
      %v1249 = vshrl.u32 %v1248, 7
      %v1250 = vsub.s32 %v1218, %v1249
      %v1251 = vrot.slane %v1173, %v1250
      %v1252 = vlaneseq
      %v1253 = vshrl.u32 %v1252, 7
      %v1254 = vsub.s32 %v1223, %v1253
      %v1255 = vrot.slane %v1176, %v1254
      %v1256 = vsel %vm1228, %v1255, %v1251
      %v1257 = vlaneseq
      %v1258 = vshrl.u32 %v1257, 7
      %v1259 = vsub.s32 %v1218, %v1258
      %v1260 = vrot.slane %v1179, %v1259
      %v1261 = vlaneseq
      %v1262 = vshrl.u32 %v1261, 7
      %v1263 = vsub.s32 %v1223, %v1262
      %v1264 = vrot.slane %v1182, %v1263
      %v1265 = vsel %vm1228, %v1264, %v1260
      %v1266 = vlaneseq
      %v1267 = vshrl.u32 %v1266, 7
      %v1268 = vsub.s32 %v1218, %v1267
      %v1269 = vrot.slane %v1185, %v1268
      %v1270 = vlaneseq
      %v1271 = vshrl.u32 %v1270, 7
      %v1272 = vsub.s32 %v1223, %v1271
      %v1273 = vrot.slane %v1188, %v1272
      %v1274 = vsel %vm1228, %v1273, %v1269
      %v1275 = vlaneseq
      %v1276 = vshrl.u32 %v1275, 7
      %v1277 = vsub.s32 %v1218, %v1276
      %v1278 = vrot.slane %v1191, %v1277
      %v1279 = vlaneseq
      %v1280 = vshrl.u32 %v1279, 7
      %v1281 = vsub.s32 %v1223, %v1280
      %v1282 = vrot.slane %v1194, %v1281
      %v1283 = vsel %vm1228, %v1282, %v1278
      %v1284 = vlaneseq
      %v1285 = vshrl.u32 %v1284, 7
      %v1286 = vsub.s32 %v1218, %v1285
      %v1287 = vrot.slane %v1197, %v1286
      %v1288 = vlaneseq
      %v1289 = vshrl.u32 %v1288, 7
      %v1290 = vsub.s32 %v1223, %v1289
      %v1291 = vrot.slane %v1200, %v1290
      %v1292 = vsel %vm1228, %v1291, %v1287
      %vm1293 = vcmask 1041409
      %v1294 = vsel %vm1293, %v1238, %v1229
      %vm1295 = vcmask 1042434
      %v1296 = vsel %vm1295, %v1247, %v1294
      %vm1297 = vcmask 1043459
      %v1298 = vsel %vm1297, %v1256, %v1296
      %vm1299 = vcmask 1044484
      %v1300 = vsel %vm1299, %v1265, %v1298
      %vm1301 = vcmask 1045509
      %v1302 = vsel %vm1301, %v1274, %v1300
      %vm1303 = vcmask 1046534
      %v1304 = vsel %vm1303, %v1283, %v1302
      %vm1305 = vcmask 1047559
      %v1306 = vsel %vm1305, %v1292, %v1304
      %vm1308 = vcmask 130048
      %v1309 = vsel %vm1308, %v1306, 0.0
      %1310 = vadd.xlane.f32.xlu0 %v1309
      %v1311 = vpop.xlane.xlu0 %1310
      %s1312 = sld [smem:[#allocation2]]
      %v1313 = vstv %s1312
      %v1314 = vadd.f32 %v1311, %v1313
      %v1315 = vsub.f32 0.0, %v1314
      %v1316 = vmul.f32 %v1315, 1.442695
      %v1317 = vpow.pop %v1316
      %v1318 = vadd.f32 %v1317, 1.0
      %v1319 = vrcp.pop %v1318
      %v1320 = vmul.f32 1.0, %v1319
      %vm1321 = vcmask 7168
      %1322 = vst.msk [vmem:[%s252] sm:$0xff] %vm1321, %v1320
      %p1323 = scmp.lt.s32.totalorder %s18, 1
      %s1324 = scalar_select %p1323, %s18, 1
      %s1325 = smul.addr %s1324, 8
      %s1326 = scalar_lea.vmem %s6, %s1325
      // Predicated region
      $region45: #{annc_forward.1} parent=43 // pred_check
        %p1327 = pneg %p167
      $region46: #{annc_forward.1} parent=43 // pred_check_branch
        %1329 = sbr.rel (%p1327) target = $region48
      $region47: #{annc_forward.1} parent=43 // pred_region
        _
      $region48: #{annc_forward.1} parent=43 // pred_fallthru
        _
    $region44: #{annc_forward.1} parent=5 // pred_fallthru
      _
    %p1330 = scmp.le.s32.totalorder 2, %s13
    // Predicated region
    $region49: #{annc_forward.1} parent=5 // pred_check
      %p1331 = pneg %p1330
    $region50: #{annc_forward.1} parent=5 // pred_check_branch
      %1333 = sbr.rel (%p1331) target = $region52
    $region51: #{annc_forward.1} parent=5 // pred_region
      %s1334 = ssub.s32 %s13, 2
      // Predicated region
      $region53: #{annc_forward.1} parent=51 // pred_check
        %p1335 = pneg %p173
      $region54: #{annc_forward.1} parent=51 // pred_check_branch
        %1337 = sbr.rel (%p1335) target = $region56
      $region55: #{annc_forward.1} parent=51 // pred_region
        %p1338 = scmp.lt.s32.totalorder %s19, 1
        %s1339 = scalar_select %p1338, %s19, 1
        %s1340 = smul.addr %s1339, 8
        %s1341 = scalar_lea.vmem %s6, %s1340
      $region56: #{annc_forward.1} parent=51 // pred_fallthru
        _
    $region52: #{annc_forward.1} parent=5 // pred_fallthru
      _
  $region6: #{annc_forward.1} parent=0 // loop_footer
    %s17 = sadd.s32 1, %s13
  $region7: #{annc_forward.1} parent=0 // loop_footer_branch
    %12 = sbr.rel target = $region3
  $region8: #{annc_forward.1} parent=0 // loop_exit
    _

</llo_original>
